<compile_context>
chip_gen: v6e
topology: v6e:2x2x1
jax: 0.10.0
libtpu: 0.0.40
codegen_flags: <defaults>
</compile_context>

<pallas_src>
import functools

import jax
import jax.numpy as jnp
from jax.experimental import pallas as pl
from jax.experimental.pallas import tpu as pltpu

EPS = 1e-5
LANES = 128          # lane-dense width for the packed vectors and the output
NEG = -1e30          # bias pad for unused output lanes -> exp() == 0 in softmax
VEC_ROWS = 16        # 13 packed rows padded to a sublane multiple

# Row indices inside the packed (VEC_ROWS, LANES) parameter-vector slab.
R_G1A, R_G1B = 0, 1          # BN1 gamma split per modality (lane-0 aligned)
R_BE1A, R_BE1B = 2, 3        # BN1 beta split per modality
R_B1 = 4                     # linear1 bias
R_G2, R_BE2, R_B2 = 5, 6, 7  # BN2 / linear2
R_G3, R_BE3, R_B3 = 8, 9, 10  # BN3 / linear3
R_B4, R_B5 = 11, 12          # classifier fc1 / fc2(bias lane-padded with NEG)


def _recip(s):
    # EUP approximate reciprocal (free slot) + one Newton step -> ~f32 accuracy.
    r = pl.reciprocal(s, approx=True)
    return r * (2.0 - s * r)


def _softmax(z):
    z = z - jnp.max(z, axis=-1, keepdims=True)
    e = jnp.exp(z)
    return e * _recip(jnp.sum(e, axis=-1, keepdims=True))


def bimodal_kernel(f1_ref, f2_ref, vec_ref,
                   w1a_ref, w1b_ref, w2_ref, w3_ref, w4_ref, w5_ref,
                   out_ref, *, dims):
    f1_dim, f2_dim, hidden, pred_out, clf_hidden = dims

    def bn(a, g_row, b_row, d):
        # BatchNorm1d training-mode forward: batch mean, biased batch variance.
        # One-pass stats, gamma folded into the rsqrt scale.
        gamma = vec_ref[g_row, :d]
        beta = vec_ref[b_row, :d]
        mu = jnp.mean(a, axis=0, keepdims=True)
        msq = jnp.mean(a * a, axis=0, keepdims=True)
        scale = gamma * jax.lax.rsqrt(msq - mu * mu + EPS)
        return a * scale + (beta - mu * scale)

    def mm(a, w_ref):
        return jnp.dot(a, w_ref[...], preferred_element_type=jnp.float32)

    # ---- Predictor / Resnet (layer_num=3 -> exactly one residual block) ----
    # linear1 on the (virtual) concat [f1, f2]: BN is per-feature, so
    # BN(concat) == [BN(f1), BN(f2)], and Linear(concat) == f1p@W1[:F1] +
    # f2p@W1[F1:].  No concat materialization anywhere.
    h = (mm(bn(f1_ref[...], R_G1A, R_BE1A, f1_dim), w1a_ref)
         + mm(bn(f2_ref[...], R_G1B, R_BE1B, f2_dim), w1b_ref)
         + vec_ref[R_B1, :hidden])
    h = jnp.maximum(h, 0.0)

    # residual block
    h = h + jnp.maximum(
        mm(bn(h, R_G2, R_BE2, hidden), w2_ref) + vec_ref[R_B2, :hidden], 0.0)

    # linear3 + predictor softmax
    p = jnp.maximum(
        mm(bn(h, R_G3, R_BE3, hidden), w3_ref) + vec_ref[R_B3, :pred_out], 0.0)
    p = _softmax(p)

    # ---- Classifier head: fc1 -> ReLU -> fc2 -> softmax ----
    # fc2 output is lane-padded to 128 (zero weight columns, -1e30 bias), so
    # the store below is a full unmasked (B, 128) slab and the softmax over the
    # padded lanes is exact on the real classes (exp(-1e30) == 0).
    c = jnp.maximum(mm(p, w4_ref) + vec_ref[R_B4, :clf_hidden], 0.0)
    c = mm(c, w5_ref) + vec_ref[R_B5, :]
    out_ref[...] = _softmax(c).astype(out_ref.dtype)


@functools.partial(jax.jit, static_argnames=("num_classes",))
def bimodal_forward(feature_1, feature_2, packed, num_classes):
    B, f1_dim = feature_1.shape
    f2_dim = feature_2.shape[1]
    hidden = packed["w1a"].shape[1]
    pred_out = packed["w3"].shape[1]
    clf_hidden = packed["w4"].shape[1]

    vmem = pl.BlockSpec(memory_space=pltpu.MemorySpace.VMEM)
    args = (feature_1, feature_2, packed["vec"],
            packed["w1a"], packed["w1b"], packed["w2"], packed["w3"],
            packed["w4"], packed["w5p"])

    out_padded = pl.pallas_call(
        functools.partial(
            bimodal_kernel,
            dims=(f1_dim, f2_dim, hidden, pred_out, clf_hidden)),
        out_shape=jax.ShapeDtypeStruct((B, LANES), jnp.float32),
        in_specs=[vmem] * len(args),
        out_specs=vmem,
    )(*args)
    return out_padded[:, :num_classes]


def init_params(key, input_dim, hidden_dim, pred_out_dim, clf_hidden, num_classes):
    """Deterministic synthetic init. Linear weights stored as (in, out) = W.T."""
    ks = jax.random.split(key, 10)

    def linw(k, fan_in, fan_out):
        return jax.random.normal(k, (fan_in, fan_out), jnp.float32) * 0.1

    def bias(k, n):
        return jax.random.normal(k, (n,), jnp.float32) * 0.01

    return {
        # BatchNorm1d default init: gamma=1, beta=0
        "g1": jnp.ones((input_dim,), jnp.float32),
        "be1": jnp.zeros((input_dim,), jnp.float32),
        "g2": jnp.ones((hidden_dim,), jnp.float32),
        "be2": jnp.zeros((hidden_dim,), jnp.float32),
        "g3": jnp.ones((hidden_dim,), jnp.float32),
        "be3": jnp.zeros((hidden_dim,), jnp.float32),
        # Predictor linears
        "w1": linw(ks[0], input_dim, hidden_dim), "b1": bias(ks[1], hidden_dim),
        "w2": linw(ks[2], hidden_dim, hidden_dim), "b2": bias(ks[3], hidden_dim),
        "w3": linw(ks[4], hidden_dim, pred_out_dim), "b3": bias(ks[5], pred_out_dim),
        # Classifier
        "w4": linw(ks[6], pred_out_dim, clf_hidden), "b4": bias(ks[7], clf_hidden),
        "w5": linw(ks[8], clf_hidden, num_classes), "b5": bias(ks[9], num_classes),
    }


def pack_params(p, f1_dim):
    """One-time (outside jit) packing for the kernel:
    - 13 small vectors -> one (16, 128) f32 slab (one DMA instead of 11+),
      with BN1 gamma/beta split per modality so every in-kernel slice starts
      at lane 0,
    - W1 split into its two modality row-blocks,
    - fc2 weight/bias lane-padded to 128 output columns (zeros / -1e30)."""
    num_classes = p["w5"].shape[1]

    def row(v, fill=0.0):
        v = jnp.asarray(v, jnp.float32).reshape(-1)
        return jnp.concatenate(
            [v, jnp.full((LANES - v.shape[0],), fill, jnp.float32)])

    g1 = p["g1"].reshape(-1)
    be1 = p["be1"].reshape(-1)
    rows = [row(g1[:f1_dim]), row(g1[f1_dim:]),
            row(be1[:f1_dim]), row(be1[f1_dim:]),
            row(p["b1"]),
            row(p["g2"]), row(p["be2"]), row(p["b2"]),
            row(p["g3"]), row(p["be3"]), row(p["b3"]),
            row(p["b4"]),
            row(p["b5"], fill=NEG)]
    vec = jnp.stack(rows, axis=0)
    vec = jnp.pad(vec, ((0, VEC_ROWS - vec.shape[0]), (0, 0)))

    w1 = p["w1"]
    return {
        "vec": vec,
        "w1a": w1[:f1_dim], "w1b": w1[f1_dim:],
        "w2": p["w2"], "w3": p["w3"], "w4": p["w4"],
        "w5p": jnp.pad(p["w5"], ((0, 0), (0, LANES - num_classes))),
    }


def _bn_ref(x, gamma, beta):
    mu = jnp.mean(x, axis=0, keepdims=True)
    var = jnp.mean((x - mu) ** 2, axis=0, keepdims=True)
    return (x - mu) * jax.lax.rsqrt(var + EPS) * gamma + beta


def reference_forward(feature_1, feature_2, p):
    """Pure-JAX reference mirroring the PyTorch forward (training-mode BN)."""
    x = jnp.concatenate([feature_1, feature_2], axis=-1)
    h = jax.nn.relu(_bn_ref(x, p["g1"], p["be1"]) @ p["w1"] + p["b1"])
    h = h + jax.nn.relu(_bn_ref(h, p["g2"], p["be2"]) @ p["w2"] + p["b2"])
    out = jax.nn.relu(_bn_ref(h, p["g3"], p["be3"]) @ p["w3"] + p["b3"])
    out = jax.nn.softmax(out, axis=-1)
    c = jax.nn.relu(out @ p["w4"] + p["b4"])
    c = c @ p["w5"] + p["b5"]
    return jax.nn.softmax(c, axis=-1)


if __name__ == "__main__":
    # Two modalities of 16 features each -> concatenated input_dim=32;
    # Predictor hidden=32, out=16; Classifier hidden=32, num_classes=4; batch=8.
    B, F1, F2 = 8, 16, 16
    INPUT_DIM = F1 + F2
    HIDDEN = 32
    PRED_OUT = 16
    CLF_HIDDEN = 32
    NUM_CLASSES = 4

    key = jax.random.PRNGKey(0)
    k1, k2, kp = jax.random.split(key, 3)
    feature_1 = jax.random.normal(k1, (B, F1), jnp.float32)
    feature_2 = jax.random.normal(k2, (B, F2), jnp.float32)
    params = init_params(kp, INPUT_DIM, HIDDEN, PRED_OUT, CLF_HIDDEN, NUM_CLASSES)
    packed = pack_params(params, f1_dim=F1)

    out = bimodal_forward(feature_1, feature_2, packed, NUM_CLASSES)
    out = jax.block_until_ready(out)

    ref = reference_forward(feature_1, feature_2, params)
    assert out.shape == (B, NUM_CLASSES)
    assert jnp.allclose(out, ref, atol=1e-5, rtol=1e-5), "mismatch vs reference"
    assert jnp.allclose(jnp.sum(out, axis=-1), 1.0, atol=1e-5)

    print("KERNEL_OK")
</pallas_src>

<mosaic_0001>
module attributes {stable_mosaic.version = 11 : i64} {
  func.func @bimodal_kernel(%arg0: memref<8x16xf32, #tpu.memory_space<vmem>>, %arg1: memref<8x16xf32, #tpu.memory_space<vmem>>, %arg2: memref<16x128xf32, #tpu.memory_space<vmem>>, %arg3: memref<16x32xf32, #tpu.memory_space<vmem>>, %arg4: memref<16x32xf32, #tpu.memory_space<vmem>>, %arg5: memref<32x32xf32, #tpu.memory_space<vmem>>, %arg6: memref<32x16xf32, #tpu.memory_space<vmem>>, %arg7: memref<16x32xf32, #tpu.memory_space<vmem>>, %arg8: memref<32x128xf32, #tpu.memory_space<vmem>>, %arg9: memref<8x128xf32, #tpu.memory_space<vmem>>) attributes {dimension_semantics = [], scalar_prefetch = 0 : i64, scratch_operands = 0 : i64, tpu.core_type = #tpu.core_type<tc>} {
    %c0 = arith.constant 0 : index
    %c0_0 = arith.constant 0 : index
    %0 = vector.load %arg0[%c0, %c0_0] : memref<8x16xf32, #tpu.memory_space<vmem>>, vector<8x16xf32>
    %c0_1 = arith.constant 0 : index
    %c0_2 = arith.constant 0 : index
    %1 = vector.load %arg2[%c0_1, %c0_2] : memref<16x128xf32, #tpu.memory_space<vmem>>, vector<1x16xf32>
    %2 = vector.shape_cast %1 : vector<1x16xf32> to vector<16xf32>
    %c2 = arith.constant 2 : index
    %c0_3 = arith.constant 0 : index
    %3 = vector.load %arg2[%c2, %c0_3] : memref<16x128xf32, #tpu.memory_space<vmem>>, vector<1x16xf32>
    %4 = vector.shape_cast %3 : vector<1x16xf32> to vector<16xf32>
    %cst = arith.constant dense<0.000000e+00> : vector<16xf32>
    %5 = vector.multi_reduction <add>, %0, %cst [0] : vector<8x16xf32> to vector<16xf32>
    %6 = vector.shape_cast %5 : vector<16xf32> to vector<1x16xf32>
    %cst_4 = arith.constant 8.000000e+00 : f32
    %7 = vector.broadcast %cst_4 : f32 to vector<1x16xf32>
    %8 = arith.divf %6, %7 : vector<1x16xf32>
    %9 = arith.mulf %0, %0 : vector<8x16xf32>
    %cst_5 = arith.constant dense<0.000000e+00> : vector<16xf32>
    %10 = vector.multi_reduction <add>, %9, %cst_5 [0] : vector<8x16xf32> to vector<16xf32>
    %11 = vector.shape_cast %10 : vector<16xf32> to vector<1x16xf32>
    %cst_6 = arith.constant 8.000000e+00 : f32
    %12 = vector.broadcast %cst_6 : f32 to vector<1x16xf32>
    %13 = arith.divf %11, %12 : vector<1x16xf32>
    %14 = arith.mulf %8, %8 : vector<1x16xf32>
    %15 = arith.subf %13, %14 : vector<1x16xf32>
    %cst_7 = arith.constant 9.99999974E-6 : f32
    %16 = vector.broadcast %cst_7 : f32 to vector<1x16xf32>
    %17 = arith.addf %15, %16 : vector<1x16xf32>
    %18 = math.rsqrt %17 : vector<1x16xf32>
    %19 = vector.shape_cast %2 : vector<16xf32> to vector<1x16xf32>
    %20 = arith.mulf %19, %18 : vector<1x16xf32>
    %21 = vector.broadcast %20 : vector<1x16xf32> to vector<8x16xf32>
    %22 = arith.mulf %0, %21 : vector<8x16xf32>
    %23 = arith.mulf %8, %20 : vector<1x16xf32>
    %24 = vector.shape_cast %4 : vector<16xf32> to vector<1x16xf32>
    %25 = arith.subf %24, %23 : vector<1x16xf32>
    %26 = vector.broadcast %25 : vector<1x16xf32> to vector<8x16xf32>
    %27 = arith.addf %22, %26 : vector<8x16xf32>
    %c0_8 = arith.constant 0 : index
    %c0_9 = arith.constant 0 : index
    %28 = vector.load %arg3[%c0_8, %c0_9] : memref<16x32xf32, #tpu.memory_space<vmem>>, vector<16x32xf32>
    %cst_10 = arith.constant dense<0.000000e+00> : vector<8x32xf32>
    %29 = tpu.matmul %27, %28, %cst_10 {dimension_numbers = #tpu.dot_dimension_numbers<[1], [0], [0], [1], [0, 0, 1, 1], [], []>} : vector<8x16xf32>, vector<16x32xf32>, vector<8x32xf32> -> vector<8x32xf32>
    %c0_11 = arith.constant 0 : index
    %c0_12 = arith.constant 0 : index
    %30 = vector.load %arg1[%c0_11, %c0_12] : memref<8x16xf32, #tpu.memory_space<vmem>>, vector<8x16xf32>
    %c1 = arith.constant 1 : index
    %c0_13 = arith.constant 0 : index
    %31 = vector.load %arg2[%c1, %c0_13] : memref<16x128xf32, #tpu.memory_space<vmem>>, vector<1x16xf32>
    %32 = vector.shape_cast %31 : vector<1x16xf32> to vector<16xf32>
    %c3 = arith.constant 3 : index
    %c0_14 = arith.constant 0 : index
    %33 = vector.load %arg2[%c3, %c0_14] : memref<16x128xf32, #tpu.memory_space<vmem>>, vector<1x16xf32>
    %34 = vector.shape_cast %33 : vector<1x16xf32> to vector<16xf32>
    %cst_15 = arith.constant dense<0.000000e+00> : vector<16xf32>
    %35 = vector.multi_reduction <add>, %30, %cst_15 [0] : vector<8x16xf32> to vector<16xf32>
    %36 = vector.shape_cast %35 : vector<16xf32> to vector<1x16xf32>
    %cst_16 = arith.constant 8.000000e+00 : f32
    %37 = vector.broadcast %cst_16 : f32 to vector<1x16xf32>
    %38 = arith.divf %36, %37 : vector<1x16xf32>
    %39 = arith.mulf %30, %30 : vector<8x16xf32>
    %cst_17 = arith.constant dense<0.000000e+00> : vector<16xf32>
    %40 = vector.multi_reduction <add>, %39, %cst_17 [0] : vector<8x16xf32> to vector<16xf32>
    %41 = vector.shape_cast %40 : vector<16xf32> to vector<1x16xf32>
    %cst_18 = arith.constant 8.000000e+00 : f32
    %42 = vector.broadcast %cst_18 : f32 to vector<1x16xf32>
    %43 = arith.divf %41, %42 : vector<1x16xf32>
    %44 = arith.mulf %38, %38 : vector<1x16xf32>
    %45 = arith.subf %43, %44 : vector<1x16xf32>
    %cst_19 = arith.constant 9.99999974E-6 : f32
    %46 = vector.broadcast %cst_19 : f32 to vector<1x16xf32>
    %47 = arith.addf %45, %46 : vector<1x16xf32>
    %48 = math.rsqrt %47 : vector<1x16xf32>
    %49 = vector.shape_cast %32 : vector<16xf32> to vector<1x16xf32>
    %50 = arith.mulf %49, %48 : vector<1x16xf32>
    %51 = vector.broadcast %50 : vector<1x16xf32> to vector<8x16xf32>
    %52 = arith.mulf %30, %51 : vector<8x16xf32>
    %53 = arith.mulf %38, %50 : vector<1x16xf32>
    %54 = vector.shape_cast %34 : vector<16xf32> to vector<1x16xf32>
    %55 = arith.subf %54, %53 : vector<1x16xf32>
    %56 = vector.broadcast %55 : vector<1x16xf32> to vector<8x16xf32>
    %57 = arith.addf %52, %56 : vector<8x16xf32>
    %c0_20 = arith.constant 0 : index
    %c0_21 = arith.constant 0 : index
    %58 = vector.load %arg4[%c0_20, %c0_21] : memref<16x32xf32, #tpu.memory_space<vmem>>, vector<16x32xf32>
    %cst_22 = arith.constant dense<0.000000e+00> : vector<8x32xf32>
    %59 = tpu.matmul %57, %58, %cst_22 {dimension_numbers = #tpu.dot_dimension_numbers<[1], [0], [0], [1], [0, 0, 1, 1], [], []>} : vector<8x16xf32>, vector<16x32xf32>, vector<8x32xf32> -> vector<8x32xf32>
    %60 = arith.addf %29, %59 : vector<8x32xf32>
    %c4 = arith.constant 4 : index
    %c0_23 = arith.constant 0 : index
    %61 = vector.load %arg2[%c4, %c0_23] : memref<16x128xf32, #tpu.memory_space<vmem>>, vector<1x32xf32>
    %62 = vector.shape_cast %61 : vector<1x32xf32> to vector<32xf32>
    %63 = vector.shape_cast %62 : vector<32xf32> to vector<1x32xf32>
    %64 = vector.broadcast %63 : vector<1x32xf32> to vector<8x32xf32>
    %65 = arith.addf %60, %64 : vector<8x32xf32>
    %cst_24 = arith.constant 0.000000e+00 : f32
    %66 = vector.broadcast %cst_24 : f32 to vector<8x32xf32>
    %67 = arith.maximumf %65, %66 : vector<8x32xf32>
    %c5 = arith.constant 5 : index
    %c0_25 = arith.constant 0 : index
    %68 = vector.load %arg2[%c5, %c0_25] : memref<16x128xf32, #tpu.memory_space<vmem>>, vector<1x32xf32>
    %69 = vector.shape_cast %68 : vector<1x32xf32> to vector<32xf32>
    %c6 = arith.constant 6 : index
    %c0_26 = arith.constant 0 : index
    %70 = vector.load %arg2[%c6, %c0_26] : memref<16x128xf32, #tpu.memory_space<vmem>>, vector<1x32xf32>
    %71 = vector.shape_cast %70 : vector<1x32xf32> to vector<32xf32>
    %cst_27 = arith.constant dense<0.000000e+00> : vector<32xf32>
    %72 = vector.multi_reduction <add>, %67, %cst_27 [0] : vector<8x32xf32> to vector<32xf32>
    %73 = vector.shape_cast %72 : vector<32xf32> to vector<1x32xf32>
    %cst_28 = arith.constant 8.000000e+00 : f32
    %74 = vector.broadcast %cst_28 : f32 to vector<1x32xf32>
    %75 = arith.divf %73, %74 : vector<1x32xf32>
    %76 = arith.mulf %67, %67 : vector<8x32xf32>
    %cst_29 = arith.constant dense<0.000000e+00> : vector<32xf32>
    %77 = vector.multi_reduction <add>, %76, %cst_29 [0] : vector<8x32xf32> to vector<32xf32>
    %78 = vector.shape_cast %77 : vector<32xf32> to vector<1x32xf32>
    %cst_30 = arith.constant 8.000000e+00 : f32
    %79 = vector.broadcast %cst_30 : f32 to vector<1x32xf32>
    %80 = arith.divf %78, %79 : vector<1x32xf32>
    %81 = arith.mulf %75, %75 : vector<1x32xf32>
    %82 = arith.subf %80, %81 : vector<1x32xf32>
    %cst_31 = arith.constant 9.99999974E-6 : f32
    %83 = vector.broadcast %cst_31 : f32 to vector<1x32xf32>
    %84 = arith.addf %82, %83 : vector<1x32xf32>
    %85 = math.rsqrt %84 : vector<1x32xf32>
    %86 = vector.shape_cast %69 : vector<32xf32> to vector<1x32xf32>
    %87 = arith.mulf %86, %85 : vector<1x32xf32>
    %88 = vector.broadcast %87 : vector<1x32xf32> to vector<8x32xf32>
    %89 = arith.mulf %67, %88 : vector<8x32xf32>
    %90 = arith.mulf %75, %87 : vector<1x32xf32>
    %91 = vector.shape_cast %71 : vector<32xf32> to vector<1x32xf32>
    %92 = arith.subf %91, %90 : vector<1x32xf32>
    %93 = vector.broadcast %92 : vector<1x32xf32> to vector<8x32xf32>
    %94 = arith.addf %89, %93 : vector<8x32xf32>
    %c0_32 = arith.constant 0 : index
    %c0_33 = arith.constant 0 : index
    %95 = vector.load %arg5[%c0_32, %c0_33] : memref<32x32xf32, #tpu.memory_space<vmem>>, vector<32x32xf32>
    %cst_34 = arith.constant dense<0.000000e+00> : vector<8x32xf32>
    %96 = tpu.matmul %94, %95, %cst_34 {dimension_numbers = #tpu.dot_dimension_numbers<[1], [0], [0], [1], [0, 0, 1, 1], [], []>} : vector<8x32xf32>, vector<32x32xf32>, vector<8x32xf32> -> vector<8x32xf32>
    %c7 = arith.constant 7 : index
    %c0_35 = arith.constant 0 : index
    %97 = vector.load %arg2[%c7, %c0_35] : memref<16x128xf32, #tpu.memory_space<vmem>>, vector<1x32xf32>
    %98 = vector.shape_cast %97 : vector<1x32xf32> to vector<32xf32>
    %99 = vector.shape_cast %98 : vector<32xf32> to vector<1x32xf32>
    %100 = vector.broadcast %99 : vector<1x32xf32> to vector<8x32xf32>
    %101 = arith.addf %96, %100 : vector<8x32xf32>
    %cst_36 = arith.constant 0.000000e+00 : f32
    %102 = vector.broadcast %cst_36 : f32 to vector<8x32xf32>
    %103 = arith.maximumf %101, %102 : vector<8x32xf32>
    %104 = arith.addf %67, %103 : vector<8x32xf32>
    %c8 = arith.constant 8 : index
    %c0_37 = arith.constant 0 : index
    %105 = vector.load %arg2[%c8, %c0_37] : memref<16x128xf32, #tpu.memory_space<vmem>>, vector<1x32xf32>
    %106 = vector.shape_cast %105 : vector<1x32xf32> to vector<32xf32>
    %c9 = arith.constant 9 : index
    %c0_38 = arith.constant 0 : index
    %107 = vector.load %arg2[%c9, %c0_38] : memref<16x128xf32, #tpu.memory_space<vmem>>, vector<1x32xf32>
    %108 = vector.shape_cast %107 : vector<1x32xf32> to vector<32xf32>
    %cst_39 = arith.constant dense<0.000000e+00> : vector<32xf32>
    %109 = vector.multi_reduction <add>, %104, %cst_39 [0] : vector<8x32xf32> to vector<32xf32>
    %110 = vector.shape_cast %109 : vector<32xf32> to vector<1x32xf32>
    %cst_40 = arith.constant 8.000000e+00 : f32
    %111 = vector.broadcast %cst_40 : f32 to vector<1x32xf32>
    %112 = arith.divf %110, %111 : vector<1x32xf32>
    %113 = arith.mulf %104, %104 : vector<8x32xf32>
    %cst_41 = arith.constant dense<0.000000e+00> : vector<32xf32>
    %114 = vector.multi_reduction <add>, %113, %cst_41 [0] : vector<8x32xf32> to vector<32xf32>
    %115 = vector.shape_cast %114 : vector<32xf32> to vector<1x32xf32>
    %cst_42 = arith.constant 8.000000e+00 : f32
    %116 = vector.broadcast %cst_42 : f32 to vector<1x32xf32>
    %117 = arith.divf %115, %116 : vector<1x32xf32>
    %118 = arith.mulf %112, %112 : vector<1x32xf32>
    %119 = arith.subf %117, %118 : vector<1x32xf32>
    %cst_43 = arith.constant 9.99999974E-6 : f32
    %120 = vector.broadcast %cst_43 : f32 to vector<1x32xf32>
    %121 = arith.addf %119, %120 : vector<1x32xf32>
    %122 = math.rsqrt %121 : vector<1x32xf32>
    %123 = vector.shape_cast %106 : vector<32xf32> to vector<1x32xf32>
    %124 = arith.mulf %123, %122 : vector<1x32xf32>
    %125 = vector.broadcast %124 : vector<1x32xf32> to vector<8x32xf32>
    %126 = arith.mulf %104, %125 : vector<8x32xf32>
    %127 = arith.mulf %112, %124 : vector<1x32xf32>
    %128 = vector.shape_cast %108 : vector<32xf32> to vector<1x32xf32>
    %129 = arith.subf %128, %127 : vector<1x32xf32>
    %130 = vector.broadcast %129 : vector<1x32xf32> to vector<8x32xf32>
    %131 = arith.addf %126, %130 : vector<8x32xf32>
    %c0_44 = arith.constant 0 : index
    %c0_45 = arith.constant 0 : index
    %132 = vector.load %arg6[%c0_44, %c0_45] : memref<32x16xf32, #tpu.memory_space<vmem>>, vector<32x16xf32>
    %cst_46 = arith.constant dense<0.000000e+00> : vector<8x16xf32>
    %133 = tpu.matmul %131, %132, %cst_46 {dimension_numbers = #tpu.dot_dimension_numbers<[1], [0], [0], [1], [0, 0, 1, 1], [], []>} : vector<8x32xf32>, vector<32x16xf32>, vector<8x16xf32> -> vector<8x16xf32>
    %c10 = arith.constant 10 : index
    %c0_47 = arith.constant 0 : index
    %134 = vector.load %arg2[%c10, %c0_47] : memref<16x128xf32, #tpu.memory_space<vmem>>, vector<1x16xf32>
    %135 = vector.shape_cast %134 : vector<1x16xf32> to vector<16xf32>
    %136 = vector.shape_cast %135 : vector<16xf32> to vector<1x16xf32>
    %137 = vector.broadcast %136 : vector<1x16xf32> to vector<8x16xf32>
    %138 = arith.addf %133, %137 : vector<8x16xf32>
    %cst_48 = arith.constant 0.000000e+00 : f32
    %139 = vector.broadcast %cst_48 : f32 to vector<8x16xf32>
    %140 = arith.maximumf %138, %139 : vector<8x16xf32>
    %cst_49 = arith.constant dense<0xFF800000> : vector<8xf32>
    %141 = vector.multi_reduction <maximumf>, %140, %cst_49 [1] : vector<8x16xf32> to vector<8xf32>
    %142 = vector.shape_cast %141 : vector<8xf32> to vector<8x1xf32>
    %143 = vector.broadcast %142 : vector<8x1xf32> to vector<8x16xf32>
    %144 = arith.subf %140, %143 : vector<8x16xf32>
    %145 = math.exp %144 : vector<8x16xf32>
    %cst_50 = arith.constant dense<0.000000e+00> : vector<8xf32>
    %146 = vector.multi_reduction <add>, %145, %cst_50 [1] : vector<8x16xf32> to vector<8xf32>
    %147 = vector.shape_cast %146 : vector<8xf32> to vector<8x1xf32>
    %148 = tpu.reciprocal %147 {approx = true} : vector<8x1xf32> -> vector<8x1xf32>
    %149 = arith.mulf %147, %148 : vector<8x1xf32>
    %cst_51 = arith.constant 2.000000e+00 : f32
    %150 = vector.broadcast %cst_51 : f32 to vector<8x1xf32>
    %151 = arith.subf %150, %149 : vector<8x1xf32>
    %152 = arith.mulf %148, %151 : vector<8x1xf32>
    %153 = vector.broadcast %152 : vector<8x1xf32> to vector<8x16xf32>
    %154 = arith.mulf %145, %153 : vector<8x16xf32>
    %c0_52 = arith.constant 0 : index
    %c0_53 = arith.constant 0 : index
    %155 = vector.load %arg7[%c0_52, %c0_53] : memref<16x32xf32, #tpu.memory_space<vmem>>, vector<16x32xf32>
    %cst_54 = arith.constant dense<0.000000e+00> : vector<8x32xf32>
    %156 = tpu.matmul %154, %155, %cst_54 {dimension_numbers = #tpu.dot_dimension_numbers<[1], [0], [0], [1], [0, 0, 1, 1], [], []>} : vector<8x16xf32>, vector<16x32xf32>, vector<8x32xf32> -> vector<8x32xf32>
    %c11 = arith.constant 11 : index
    %c0_55 = arith.constant 0 : index
    %157 = vector.load %arg2[%c11, %c0_55] : memref<16x128xf32, #tpu.memory_space<vmem>>, vector<1x32xf32>
    %158 = vector.shape_cast %157 : vector<1x32xf32> to vector<32xf32>
    %159 = vector.shape_cast %158 : vector<32xf32> to vector<1x32xf32>
    %160 = vector.broadcast %159 : vector<1x32xf32> to vector<8x32xf32>
    %161 = arith.addf %156, %160 : vector<8x32xf32>
    %cst_56 = arith.constant 0.000000e+00 : f32
    %162 = vector.broadcast %cst_56 : f32 to vector<8x32xf32>
    %163 = arith.maximumf %161, %162 : vector<8x32xf32>
    %c0_57 = arith.constant 0 : index
    %c0_58 = arith.constant 0 : index
    %164 = vector.load %arg8[%c0_57, %c0_58] : memref<32x128xf32, #tpu.memory_space<vmem>>, vector<32x128xf32>
    %cst_59 = arith.constant dense<0.000000e+00> : vector<8x128xf32>
    %165 = tpu.matmul %163, %164, %cst_59 {dimension_numbers = #tpu.dot_dimension_numbers<[1], [0], [0], [1], [0, 0, 1, 1], [], []>} : vector<8x32xf32>, vector<32x128xf32>, vector<8x128xf32> -> vector<8x128xf32>
    %c12 = arith.constant 12 : index
    %c0_60 = arith.constant 0 : index
    %166 = vector.load %arg2[%c12, %c0_60] : memref<16x128xf32, #tpu.memory_space<vmem>>, vector<1x128xf32>
    %167 = vector.shape_cast %166 : vector<1x128xf32> to vector<128xf32>
    %168 = vector.shape_cast %167 : vector<128xf32> to vector<1x128xf32>
    %169 = vector.broadcast %168 : vector<1x128xf32> to vector<8x128xf32>
    %170 = arith.addf %165, %169 : vector<8x128xf32>
    %cst_61 = arith.constant dense<0xFF800000> : vector<8xf32>
    %171 = vector.multi_reduction <maximumf>, %170, %cst_61 [1] : vector<8x128xf32> to vector<8xf32>
    %172 = vector.shape_cast %171 : vector<8xf32> to vector<8x1xf32>
    %173 = vector.broadcast %172 : vector<8x1xf32> to vector<8x128xf32>
    %174 = arith.subf %170, %173 : vector<8x128xf32>
    %175 = math.exp %174 : vector<8x128xf32>
    %cst_62 = arith.constant dense<0.000000e+00> : vector<8xf32>
    %176 = vector.multi_reduction <add>, %175, %cst_62 [1] : vector<8x128xf32> to vector<8xf32>
    %177 = vector.shape_cast %176 : vector<8xf32> to vector<8x1xf32>
    %178 = tpu.reciprocal %177 {approx = true} : vector<8x1xf32> -> vector<8x1xf32>
    %179 = arith.mulf %177, %178 : vector<8x1xf32>
    %cst_63 = arith.constant 2.000000e+00 : f32
    %180 = vector.broadcast %cst_63 : f32 to vector<8x1xf32>
    %181 = arith.subf %180, %179 : vector<8x1xf32>
    %182 = arith.mulf %178, %181 : vector<8x1xf32>
    %183 = vector.broadcast %182 : vector<8x1xf32> to vector<8x128xf32>
    %184 = arith.mulf %175, %183 : vector<8x128xf32>
    %c0_64 = arith.constant 0 : index
    %c0_65 = arith.constant 0 : index
    %185 = vector.load %arg9[%c0_64, %c0_65] : memref<8x128xf32, #tpu.memory_space<vmem>>, vector<8x128xf32>
    tpu.vector_store %arg9[%c0_64, %c0_65], %184 {strides = array<i32>} : memref<8x128xf32, #tpu.memory_space<vmem>>, vector<8x128xf32>,
    return
  }
}

</mosaic_0001>

<llo_original>
// kernel: bimodal_forward.1
$region0: #{bimodal_forward.1}
  #allocation0 [shape = 'u32[]', space=smem, size = 0x4, offset = 0x4, fixed_abs, tag = 'smem constant byte address 0x4 - core index']
  #allocation1 [shape = 'u32[144,128]{1,0:T(1,128)}', space=vmem, size = 0x12000, scoped, tag = 'internal scratch']
  %s0 = inlined_call_operand.vmem [shape: f32[8,16], index: 0, kind: input, shape index: {}]
  %s1 = inlined_call_operand.hbm [shape: f32[8,16], index: 1, kind: input, shape index: {}]
  %s2 = inlined_call_operand.vmem [shape: f32[16,128], index: 2, kind: input, shape index: {}]
  %s3 = inlined_call_operand.hbm [shape: f32[16,32], index: 3, kind: input, shape index: {}]
  %s4 = inlined_call_operand.hbm [shape: f32[16,32], index: 4, kind: input, shape index: {}]
  %s5 = inlined_call_operand.vmem [shape: f32[32,32], index: 5, kind: input, shape index: {}]
  %s6 = inlined_call_operand.vmem [shape: f32[32,16], index: 6, kind: input, shape index: {}]
  %s7 = inlined_call_operand.hbm [shape: f32[16,32], index: 7, kind: input, shape index: {}]
  %s8 = inlined_call_operand.hbm [shape: f32[32,128], index: 8, kind: input, shape index: {}]
  %s9 = inlined_call_operand.vmem [shape: f32[8,128], index: 9, kind: output, shape index: {}]
  %s10 = sld [smem:[#allocation0]]
  $region66: #{bimodal_forward.1} parent=0
    _
  %s12 = ssub.s32 1, %s10
  %s13 = scalar_select 0, %s12, %s10
  $region1: #{bimodal_forward.1} parent=0
    #allocation2 [shape = 'u8[4096]{0}', space=vmem, size = 0x1000, scoped, tag = 'input window, operand 1, single buffered']
    #allocation3 [shape = 's32[1]{0}', space=sflag, size = 0x4, scoped, tag = 'scoped memory for bimodal_forward.1']
    #allocation4 [shape = 'u8[8192]{0}', space=vmem, size = 0x2000, scoped, tag = 'input window, operand 3, single buffered']
    #allocation5 [shape = 's32[1]{0}', space=sflag, size = 0x4, scoped, tag = 'scoped memory for bimodal_forward.1']
    #allocation6 [shape = 'u8[8192]{0}', space=vmem, size = 0x2000, scoped, tag = 'input window, operand 4, single buffered']
    #allocation7 [shape = 'u8[8192]{0}', space=vmem, size = 0x2000, scoped, tag = 'input window, operand 7, single buffered']
    #allocation8 [shape = 's32[1]{0}', space=sflag, size = 0x4, scoped, tag = 'scoped memory for bimodal_forward.1']
    #allocation9 [shape = 'u8[16384]{0}', space=vmem, size = 0x4000, scoped, tag = 'input window, operand 8, single buffered']
    %14 = vsyncpa [#allocation3], 0
    %15 = vsyncpa [#allocation5], 0
    %16 = vsyncpa [#allocation8], 0
    // Predicated region
    $region2: #{bimodal_forward.1} parent=1 // pred_check
      _
    $region3: #{bimodal_forward.1} parent=1 // pred_check_branch
      %18 = sbr.rel (0) target = $region5
    $region4: #{bimodal_forward.1} parent=1 // pred_region
      _
    $region5: #{bimodal_forward.1} parent=1 // pred_fallthru
      _
    // Predicated region
    $region6: #{bimodal_forward.1} parent=1 // pred_check
      _
    $region7: #{bimodal_forward.1} parent=1 // pred_check_branch
      %20 = sbr.rel (0) target = $region9
    $region8: #{bimodal_forward.1} parent=1 // pred_region
      %s22 = ssub.s32 128, 128
      %23 = vsyncadd [#allocation3], %s22
      %s25 = sshll.u32 [#allocation2], 4
      %s26 = int_to_ptr.vmem [resolvable:$true] %s25
      %28 = dma.hbm_to_vmem [thread:$0]  %s1, 128, %s26, [#allocation3]
    $region9: #{bimodal_forward.1} parent=1 // pred_fallthru
      _
    // Predicated region
    $region10: #{bimodal_forward.1} parent=1 // pred_check
      _
    $region11: #{bimodal_forward.1} parent=1 // pred_check_branch
      %30 = sbr.rel (0) target = $region13
    $region12: #{bimodal_forward.1} parent=1 // pred_region
      _
    $region13: #{bimodal_forward.1} parent=1 // pred_fallthru
      _
    // Predicated region
    $region14: #{bimodal_forward.1} parent=1 // pred_check
      _
    $region15: #{bimodal_forward.1} parent=1 // pred_check_branch
      %32 = sbr.rel (0) target = $region17
    $region16: #{bimodal_forward.1} parent=1 // pred_region
      %s34 = ssub.s32 256, 256
      %35 = vsyncadd [#allocation5], %s34
      %s36 = sshll.u32 [#allocation4], 4
      %s37 = int_to_ptr.vmem [resolvable:$true] %s36
      %42 = dma.hbm_to_vmem [thread:$0]  %s3, 256, %s37, [#allocation5], 128, 128, 8
    $region17: #{bimodal_forward.1} parent=1 // pred_fallthru
      _
    // Predicated region
    $region18: #{bimodal_forward.1} parent=1 // pred_check
      _
    $region19: #{bimodal_forward.1} parent=1 // pred_check_branch
      %44 = sbr.rel (0) target = $region21
    $region20: #{bimodal_forward.1} parent=1 // pred_region
      %s46 = ssub.s32 256, 256
      %47 = vsyncadd [#allocation5], %s46
      %s48 = sshll.u32 [#allocation6], 4
      %s49 = int_to_ptr.vmem [resolvable:$true] %s48
      %54 = dma.hbm_to_vmem [thread:$0]  %s4, 256, %s49, [#allocation5], 128, 128, 8
    $region21: #{bimodal_forward.1} parent=1 // pred_fallthru
      _
    // Predicated region
    $region22: #{bimodal_forward.1} parent=1 // pred_check
      _
    $region23: #{bimodal_forward.1} parent=1 // pred_check_branch
      %56 = sbr.rel (0) target = $region25
    $region24: #{bimodal_forward.1} parent=1 // pred_region
      _
    $region25: #{bimodal_forward.1} parent=1 // pred_fallthru
      _
    // Predicated region
    $region26: #{bimodal_forward.1} parent=1 // pred_check
      _
    $region27: #{bimodal_forward.1} parent=1 // pred_check_branch
      %58 = sbr.rel (0) target = $region29
    $region28: #{bimodal_forward.1} parent=1 // pred_region
      _
    $region29: #{bimodal_forward.1} parent=1 // pred_fallthru
      _
    // Predicated region
    $region30: #{bimodal_forward.1} parent=1 // pred_check
      _
    $region31: #{bimodal_forward.1} parent=1 // pred_check_branch
      %60 = sbr.rel (0) target = $region33
    $region32: #{bimodal_forward.1} parent=1 // pred_region
      %s62 = ssub.s32 256, 256
      %63 = vsyncadd [#allocation8], %s62
      %s64 = sshll.u32 [#allocation7], 4
      %s65 = int_to_ptr.vmem [resolvable:$true] %s64
      %70 = dma.hbm_to_vmem [thread:$0]  %s7, 256, %s65, [#allocation8], 128, 128, 8
    $region33: #{bimodal_forward.1} parent=1 // pred_fallthru
      _
    // Predicated region
    $region34: #{bimodal_forward.1} parent=1 // pred_check
      _
    $region35: #{bimodal_forward.1} parent=1 // pred_check_branch
      %72 = sbr.rel (0) target = $region37
    $region36: #{bimodal_forward.1} parent=1 // pred_region
      %s74 = ssub.s32 512, 512
      %75 = vsyncadd [#allocation8], %s74
      %s76 = sshll.u32 [#allocation9], 4
      %s77 = int_to_ptr.vmem [resolvable:$true] %s76
      %82 = dma.hbm_to_vmem [thread:$0]  %s8, 512, %s77, [#allocation8], 128, 128, 8
    $region37: #{bimodal_forward.1} parent=1 // pred_fallthru
      _
    // Predicated region
    $region38: #{bimodal_forward.1} parent=1 // pred_check
      _
    $region39: #{bimodal_forward.1} parent=1 // pred_check_branch
      %84 = sbr.rel (0) target = $region41
    $region40: #{bimodal_forward.1} parent=1 // pred_region
      %85 = dma.done [#allocation3], 128
    $region41: #{bimodal_forward.1} parent=1 // pred_fallthru
      _
    // Predicated region
    $region42: #{bimodal_forward.1} parent=1 // pred_check
      _
    $region43: #{bimodal_forward.1} parent=1 // pred_check_branch
      %87 = sbr.rel (0) target = $region45
    $region44: #{bimodal_forward.1} parent=1 // pred_region
      %88 = dma.done [#allocation5], 256
    $region45: #{bimodal_forward.1} parent=1 // pred_fallthru
      _
    // Predicated region
    $region46: #{bimodal_forward.1} parent=1 // pred_check
      _
    $region47: #{bimodal_forward.1} parent=1 // pred_check_branch
      %90 = sbr.rel (0) target = $region49
    $region48: #{bimodal_forward.1} parent=1 // pred_region
      %91 = dma.done [#allocation5], 256
    $region49: #{bimodal_forward.1} parent=1 // pred_fallthru
      _
    // Predicated region
    $region50: #{bimodal_forward.1} parent=1 // pred_check
      _
    $region51: #{bimodal_forward.1} parent=1 // pred_check_branch
      %93 = sbr.rel (0) target = $region53
    $region52: #{bimodal_forward.1} parent=1 // pred_region
      %94 = dma.done [#allocation8], 256
    $region53: #{bimodal_forward.1} parent=1 // pred_fallthru
      _
    // Predicated region
    $region54: #{bimodal_forward.1} parent=1 // pred_check
      _
    $region55: #{bimodal_forward.1} parent=1 // pred_check_branch
      %96 = sbr.rel (0) target = $region57
    $region56: #{bimodal_forward.1} parent=1 // pred_region
      %97 = dma.done [#allocation8], 512
    $region57: #{bimodal_forward.1} parent=1 // pred_fallthru
      _
    %v98 = vld [vmem:[%s0] sm:$0xff]
    %v99 = vld [vmem:[%s2] sm:$0x1]
    %v100 = vld [vmem:[%s2 + $0x2] sm:$0x1]
    %vm101 = vcmask 130048
    %v102 = vsel %vm101, %v98, 0.0
    %v103 = vrot.slane %v102, 4
    %v104 = vadd.f32 %v102, %v103
    %v105 = vrot.slane %v104, 2
    %v106 = vadd.f32 %v104, %v105
    %v107 = vrot.slane %v106, 1
    %v108 = vadd.f32 %v106, %v107
    %v109 = vrcp.pop 8.0
    %v110 = vmul.f32 %v108, %v109
    %v111 = vmul.f32 %v98, %v98
    %v112 = vsel %vm101, %v111, 0.0
    %v113 = vrot.slane %v112, 4
    %v114 = vadd.f32 %v112, %v113
    %v115 = vrot.slane %v114, 2
    %v116 = vadd.f32 %v114, %v115
    %v117 = vrot.slane %v116, 1
    %v118 = vadd.f32 %v116, %v117
    %v119 = vmul.f32 %v118, %v109
    %v120 = vmul.f32 %v110, %v110
    %v121 = vsub.f32 %v119, %v120
    %v122 = vadd.f32 %v121, 1e-05
    %v123 = vrsqrt.pop %v122
    %v124 = vmul.f32 %v99, %v123
    %v125 = vlaneseq
    %v126 = vshrl.u32 %v125, 7
    %v127 = vsub.s32 0, %v126
    %v128 = vrot.slane %v124, %v127
    %v129 = vmul.f32 %v98, %v128
    %v130 = vmul.f32 %v110, %v124
    %v131 = vsub.f32 %v100, %v130
    %v132 = vlaneseq
    %v133 = vshrl.u32 %v132, 7
    %v134 = vsub.s32 0, %v133
    %v135 = vrot.slane %v131, %v134
    %v136 = vadd.f32 %v129, %v135
    %v137 = vld [vmem:[#allocation4] sm:$0xff]
    %v138 = vld [vmem:[#allocation4 + $0x8] sm:$0xff]
    %v139 = vld [vmem:[#allocation2] sm:$0xff]
    %v140 = vld [vmem:[%s2 + $0x1] sm:$0x1]
    %v141 = vld [vmem:[%s2 + $0x3] sm:$0x1]
    %v142 = vsel %vm101, %v139, 0.0
    %v143 = vrot.slane %v142, 4
    %v144 = vadd.f32 %v142, %v143
    %v145 = vrot.slane %v144, 2
    %v146 = vadd.f32 %v144, %v145
    %v147 = vrot.slane %v146, 1
    %v148 = vadd.f32 %v146, %v147
    %v149 = vmul.f32 %v148, %v109
    %v150 = vmul.f32 %v139, %v139
    %v151 = vsel %vm101, %v150, 0.0
    %v152 = vrot.slane %v151, 4
    %v153 = vadd.f32 %v151, %v152
    %v154 = vrot.slane %v153, 2
    %v155 = vadd.f32 %v153, %v154
    %v156 = vrot.slane %v155, 1
    %v157 = vadd.f32 %v155, %v156
    %v158 = vmul.f32 %v157, %v109
    %v159 = vmul.f32 %v149, %v149
    %v160 = vsub.f32 %v158, %v159
    %v161 = vadd.f32 %v160, 1e-05
    %v162 = vrsqrt.pop %v161
    %v163 = vmul.f32 %v140, %v162
    %v164 = vlaneseq
    %v165 = vshrl.u32 %v164, 7
    %v166 = vsub.s32 0, %v165
    %v167 = vrot.slane %v163, %v166
    %v168 = vmul.f32 %v139, %v167
    %v169 = vmul.f32 %v149, %v163
    %v170 = vsub.f32 %v141, %v169
    %v171 = vlaneseq
    %v172 = vshrl.u32 %v171, 7
    %v173 = vsub.s32 0, %v172
    %v174 = vrot.slane %v170, %v173
    %v175 = vadd.f32 %v168, %v174
    %v176 = vld [vmem:[#allocation6] sm:$0xff]
    %v177 = vld [vmem:[#allocation6 + $0x8] sm:$0xff]
    %v179 = vsel %vm101, %v175, 0
    %181 = vmatprep.subr.mxu0 0.0
    %182 = vmatpush1.msra.mxu0 0.0
    %183 = vmatprep.subr.mxu0 0.0
    %184 = vmatpush1.msra.mxu0 0.0
    %185 = vmatprep.subr.mxu0 0.0
    %186 = vmatpush1.msra.mxu0 0.0
    %187 = vmatprep.subr.mxu0 0.0
    %188 = vmatpush1.msra.mxu0 0.0
    %189 = vmatprep.subr.mxu0 0.0
    %190 = vmatpush1.msra.mxu0 0.0
    %191 = vmatprep.subr.mxu0 0.0
    %192 = vmatpush1.msra.mxu0 0.0
    %193 = vmatprep.subr.mxu0 0.0
    %194 = vmatpush1.msra.mxu0 0.0
    %195 = vmatprep.subr.mxu0 0.0
    %196 = vmatpush1.msra.mxu0 0.0
    %197 = vmatprep.subr.mxu0 0.0
    %198 = vmatpush1.msra.mxu0 0.0
    %199 = vmatprep.subr.mxu0 0.0
    %200 = vmatpush1.msra.mxu0 0.0
    %201 = vmatprep.subr.mxu0 0.0
    %202 = vmatpush1.msra.mxu0 0.0
    %203 = vmatprep.subr.mxu0 0.0
    %204 = vmatpush1.msra.mxu0 0.0
    %205 = vmatprep.subr.mxu0 0.0
    %206 = vmatpush1.msra.mxu0 0.0
    %207 = vmatprep.subr.mxu0 0.0
    %208 = vmatpush1.msra.mxu0 0.0
    %209 = vmatprep.subr.mxu0 0.0
    %210 = vmatpush1.msra.mxu0 %v177
    %211 = vmatprep.subr.mxu0 0.0
    %212 = vmatpush1.msra.mxu0 %v176
    %213 = vmatprep.subr.mxu0 0.0
    %214 = vmatpush2.msra.mxu0 0.0
    %215 = vmatprep.subr.mxu0 0.0
    %216 = vmatpush2.msra.mxu0 0.0
    %217 = vmatprep.subr.mxu0 0.0
    %218 = vmatpush2.msra.mxu0 0.0
    %219 = vmatprep.subr.mxu0 0.0
    %220 = vmatpush2.msra.mxu0 0.0
    %221 = vmatprep.subr.mxu0 0.0
    %222 = vmatpush2.msra.mxu0 0.0
    %223 = vmatprep.subr.mxu0 0.0
    %224 = vmatpush2.msra.mxu0 0.0
    %225 = vmatprep.subr.mxu0 0.0
    %226 = vmatpush2.msra.mxu0 0.0
    %227 = vmatprep.subr.mxu0 0.0
    %228 = vmatpush2.msra.mxu0 0.0
    %229 = vmatprep.subr.mxu0 0.0
    %230 = vmatpush2.msra.mxu0 0.0
    %231 = vmatprep.subr.mxu0 0.0
    %232 = vmatpush2.msra.mxu0 0.0
    %233 = vmatprep.subr.mxu0 0.0
    %234 = vmatpush2.msra.mxu0 0.0
    %235 = vmatprep.subr.mxu0 0.0
    %236 = vmatpush2.msra.mxu0 0.0
    %237 = vmatprep.subr.mxu0 0.0
    %238 = vmatpush2.msra.mxu0 0.0
    %239 = vmatprep.subr.mxu0 0.0
    %240 = vmatpush2.msra.mxu0 0.0
    %241 = vmatprep.subr.mxu0 0.0
    %242 = vmatpush2.msra.mxu0 0.0
    %243 = vmatprep.subr.mxu0 0.0
    %244 = vmatpush2.msra.mxu0 0.0
    %245 = vmatprep.mubr.f32.mxu0 0.0
    %246 = vmatmul.mubr.f32.gmra.mxu0 %v179
    %v247 = vpop.f32.mrf.mxu0
    %v248 = vadd.f32 0.0, %v247
    %v249 = vpop.f32.mrf.mxu0
    %250 = vdwg.mxu0
    %v252 = vsel %vm101, %v136, 0
    %254 = vmatprep.subr.mxu0 0.0
    %255 = vmatpush1.msra.mxu0 0.0
    %256 = vmatprep.subr.mxu0 0.0
    %257 = vmatpush1.msra.mxu0 0.0
    %258 = vmatprep.subr.mxu0 0.0
    %259 = vmatpush1.msra.mxu0 0.0
    %260 = vmatprep.subr.mxu0 0.0
    %261 = vmatpush1.msra.mxu0 0.0
    %262 = vmatprep.subr.mxu0 0.0
    %263 = vmatpush1.msra.mxu0 0.0
    %264 = vmatprep.subr.mxu0 0.0
    %265 = vmatpush1.msra.mxu0 0.0
    %266 = vmatprep.subr.mxu0 0.0
    %267 = vmatpush1.msra.mxu0 0.0
    %268 = vmatprep.subr.mxu0 0.0
    %269 = vmatpush1.msra.mxu0 0.0
    %270 = vmatprep.subr.mxu0 0.0
    %271 = vmatpush1.msra.mxu0 0.0
    %272 = vmatprep.subr.mxu0 0.0
    %273 = vmatpush1.msra.mxu0 0.0
    %274 = vmatprep.subr.mxu0 0.0
    %275 = vmatpush1.msra.mxu0 0.0
    %276 = vmatprep.subr.mxu0 0.0
    %277 = vmatpush1.msra.mxu0 0.0
    %278 = vmatprep.subr.mxu0 0.0
    %279 = vmatpush1.msra.mxu0 0.0
    %280 = vmatprep.subr.mxu0 0.0
    %281 = vmatpush1.msra.mxu0 0.0
    %282 = vmatprep.subr.mxu0 0.0
    %283 = vmatpush1.msra.mxu0 %v138
    %284 = vmatprep.subr.mxu0 0.0
    %285 = vmatpush1.msra.mxu0 %v137
    %286 = vmatprep.subr.mxu0 0.0
    %287 = vmatpush2.msra.mxu0 0.0
    %288 = vmatprep.subr.mxu0 0.0
    %289 = vmatpush2.msra.mxu0 0.0
    %290 = vmatprep.subr.mxu0 0.0
    %291 = vmatpush2.msra.mxu0 0.0
    %292 = vmatprep.subr.mxu0 0.0
    %293 = vmatpush2.msra.mxu0 0.0
    %294 = vmatprep.subr.mxu0 0.0
    %295 = vmatpush2.msra.mxu0 0.0
    %296 = vmatprep.subr.mxu0 0.0
    %297 = vmatpush2.msra.mxu0 0.0
    %298 = vmatprep.subr.mxu0 0.0
    %299 = vmatpush2.msra.mxu0 0.0
    %300 = vmatprep.subr.mxu0 0.0
    %301 = vmatpush2.msra.mxu0 0.0
    %302 = vmatprep.subr.mxu0 0.0
    %303 = vmatpush2.msra.mxu0 0.0
    %304 = vmatprep.subr.mxu0 0.0
    %305 = vmatpush2.msra.mxu0 0.0
    %306 = vmatprep.subr.mxu0 0.0
    %307 = vmatpush2.msra.mxu0 0.0
    %308 = vmatprep.subr.mxu0 0.0
    %309 = vmatpush2.msra.mxu0 0.0
    %310 = vmatprep.subr.mxu0 0.0
    %311 = vmatpush2.msra.mxu0 0.0
    %312 = vmatprep.subr.mxu0 0.0
    %313 = vmatpush2.msra.mxu0 0.0
    %314 = vmatprep.subr.mxu0 0.0
    %315 = vmatpush2.msra.mxu0 0.0
    %316 = vmatprep.subr.mxu0 0.0
    %317 = vmatpush2.msra.mxu0 0.0
    %318 = vmatprep.mubr.f32.mxu0 0.0
    %319 = vmatmul.mubr.f32.gmra.mxu0 %v252
    %v320 = vpop.f32.mrf.mxu0
    %v321 = vadd.f32 %v248, %v320
    %v322 = vpop.f32.mrf.mxu0
    %323 = vdwg.mxu0
    %v324 = vld [vmem:[%s2 + $0x4] sm:$0x1]
    %v325 = vlaneseq
    %v326 = vshrl.u32 %v325, 7
    %v327 = vsub.s32 0, %v326
    %v328 = vrot.slane %v324, %v327
    %v329 = vadd.f32 %v321, %v328
    %v330 = vmax.f32 %v329, 0.0
    %v331 = vld [vmem:[%s2 + $0x5] sm:$0x1]
    %v332 = vld [vmem:[%s2 + $0x6] sm:$0x1]
    %vm333 = vcmask 261120
    %v334 = vsel %vm333, %v330, 0.0
    %v335 = vrot.slane %v334, 4
    %v336 = vadd.f32 %v334, %v335
    %v337 = vrot.slane %v336, 2
    %v338 = vadd.f32 %v336, %v337
    %v339 = vrot.slane %v338, 1
    %v340 = vadd.f32 %v338, %v339
    %v341 = vmul.f32 %v340, %v109
    %v342 = vmul.f32 %v330, %v330
    %v343 = vsel %vm333, %v342, 0.0
    %v344 = vrot.slane %v343, 4
    %v345 = vadd.f32 %v343, %v344
    %v346 = vrot.slane %v345, 2
    %v347 = vadd.f32 %v345, %v346
    %v348 = vrot.slane %v347, 1
    %v349 = vadd.f32 %v347, %v348
    %v350 = vmul.f32 %v349, %v109
    %v351 = vmul.f32 %v341, %v341
    %v352 = vsub.f32 %v350, %v351
    %v353 = vadd.f32 %v352, 1e-05
    %v354 = vrsqrt.pop %v353
    %v355 = vmul.f32 %v331, %v354
    %v356 = vlaneseq
    %v357 = vshrl.u32 %v356, 7
    %v358 = vsub.s32 0, %v357
    %v359 = vrot.slane %v355, %v358
    %v360 = vmul.f32 %v330, %v359
    %v361 = vmul.f32 %v341, %v355
    %v362 = vsub.f32 %v332, %v361
    %v363 = vlaneseq
    %v364 = vshrl.u32 %v363, 7
    %v365 = vsub.s32 0, %v364
    %v366 = vrot.slane %v362, %v365
    %v367 = vadd.f32 %v360, %v366
    %v368 = vld [vmem:[%s5] sm:$0xff]
    %v369 = vld [vmem:[%s5 + $0x8] sm:$0xff]
    %v370 = vld [vmem:[%s5 + $0x10] sm:$0xff]
    %v371 = vld [vmem:[%s5 + $0x18] sm:$0xff]
    %v372 = vld [vmem:[%s2 + $0x7] sm:$0x1]
    %v373 = vlaneseq
    %v374 = vshrl.u32 %v373, 7
    %v375 = vsub.s32 0, %v374
    %v376 = vrot.slane %v372, %v375
    %v378 = vsel %vm333, %v367, 0
    %380 = vmatprep.subr.mxu0 0.0
    %381 = vmatpush1.msra.mxu0 0.0
    %382 = vmatprep.subr.mxu0 0.0
    %383 = vmatpush1.msra.mxu0 0.0
    %384 = vmatprep.subr.mxu0 0.0
    %385 = vmatpush1.msra.mxu0 0.0
    %386 = vmatprep.subr.mxu0 0.0
    %387 = vmatpush1.msra.mxu0 0.0
    %388 = vmatprep.subr.mxu0 0.0
    %389 = vmatpush1.msra.mxu0 0.0
    %390 = vmatprep.subr.mxu0 0.0
    %391 = vmatpush1.msra.mxu0 0.0
    %392 = vmatprep.subr.mxu0 0.0
    %393 = vmatpush1.msra.mxu0 0.0
    %394 = vmatprep.subr.mxu0 0.0
    %395 = vmatpush1.msra.mxu0 0.0
    %396 = vmatprep.subr.mxu0 0.0
    %397 = vmatpush1.msra.mxu0 0.0
    %398 = vmatprep.subr.mxu0 0.0
    %399 = vmatpush1.msra.mxu0 0.0
    %400 = vmatprep.subr.mxu0 0.0
    %401 = vmatpush1.msra.mxu0 0.0
    %402 = vmatprep.subr.mxu0 0.0
    %403 = vmatpush1.msra.mxu0 0.0
    %404 = vmatprep.subr.mxu0 0.0
    %405 = vmatpush1.msra.mxu0 %v371
    %406 = vmatprep.subr.mxu0 0.0
    %407 = vmatpush1.msra.mxu0 %v370
    %408 = vmatprep.subr.mxu0 0.0
    %409 = vmatpush1.msra.mxu0 %v369
    %410 = vmatprep.subr.mxu0 0.0
    %411 = vmatpush1.msra.mxu0 %v368
    %412 = vmatprep.subr.mxu0 0.0
    %413 = vmatpush2.msra.mxu0 0.0
    %414 = vmatprep.subr.mxu0 0.0
    %415 = vmatpush2.msra.mxu0 0.0
    %416 = vmatprep.subr.mxu0 0.0
    %417 = vmatpush2.msra.mxu0 0.0
    %418 = vmatprep.subr.mxu0 0.0
    %419 = vmatpush2.msra.mxu0 0.0
    %420 = vmatprep.subr.mxu0 0.0
    %421 = vmatpush2.msra.mxu0 0.0
    %422 = vmatprep.subr.mxu0 0.0
    %423 = vmatpush2.msra.mxu0 0.0
    %424 = vmatprep.subr.mxu0 0.0
    %425 = vmatpush2.msra.mxu0 0.0
    %426 = vmatprep.subr.mxu0 0.0
    %427 = vmatpush2.msra.mxu0 0.0
    %428 = vmatprep.subr.mxu0 0.0
    %429 = vmatpush2.msra.mxu0 0.0
    %430 = vmatprep.subr.mxu0 0.0
    %431 = vmatpush2.msra.mxu0 0.0
    %432 = vmatprep.subr.mxu0 0.0
    %433 = vmatpush2.msra.mxu0 0.0
    %434 = vmatprep.subr.mxu0 0.0
    %435 = vmatpush2.msra.mxu0 0.0
    %436 = vmatprep.subr.mxu0 0.0
    %437 = vmatpush2.msra.mxu0 0.0
    %438 = vmatprep.subr.mxu0 0.0
    %439 = vmatpush2.msra.mxu0 0.0
    %440 = vmatprep.subr.mxu0 0.0
    %441 = vmatpush2.msra.mxu0 0.0
    %442 = vmatprep.subr.mxu0 0.0
    %443 = vmatpush2.msra.mxu0 0.0
    %444 = vmatprep.mubr.f32.mxu0 0.0
    %445 = vmatmul.mubr.f32.gmra.mxu0 %v378
    %v446 = vpop.f32.mrf.mxu0
    %v447 = vadd.f32 %v376, %v446
    %v448 = vpop.f32.mrf.mxu0
    %449 = vdwg.mxu0
    %v450 = vmax.f32 %v447, 0.0
    %v451 = vadd.f32 %v330, %v450
    %v452 = vld [vmem:[%s2 + $0x8] sm:$0x1]
    %v453 = vld [vmem:[%s2 + $0x9] sm:$0x1]
    %v454 = vsel %vm333, %v451, 0.0
    %v455 = vrot.slane %v454, 4
    %v456 = vadd.f32 %v454, %v455
    %v457 = vrot.slane %v456, 2
    %v458 = vadd.f32 %v456, %v457
    %v459 = vrot.slane %v458, 1
    %v460 = vadd.f32 %v458, %v459
    %v461 = vmul.f32 %v460, %v109
    %v462 = vmul.f32 %v451, %v451
    %v463 = vsel %vm333, %v462, 0.0
    %v464 = vrot.slane %v463, 4
    %v465 = vadd.f32 %v463, %v464
    %v466 = vrot.slane %v465, 2
    %v467 = vadd.f32 %v465, %v466
    %v468 = vrot.slane %v467, 1
    %v469 = vadd.f32 %v467, %v468
    %v470 = vmul.f32 %v469, %v109
    %v471 = vmul.f32 %v461, %v461
    %v472 = vsub.f32 %v470, %v471
    %v473 = vadd.f32 %v472, 1e-05
    %v474 = vrsqrt.pop %v473
    %v475 = vmul.f32 %v452, %v474
    %v476 = vlaneseq
    %v477 = vshrl.u32 %v476, 7
    %v478 = vsub.s32 0, %v477
    %v479 = vrot.slane %v475, %v478
    %v480 = vmul.f32 %v451, %v479
    %v481 = vmul.f32 %v461, %v475
    %v482 = vsub.f32 %v453, %v481
    %v483 = vlaneseq
    %v484 = vshrl.u32 %v483, 7
    %v485 = vsub.s32 0, %v484
    %v486 = vrot.slane %v482, %v485
    %v487 = vadd.f32 %v480, %v486
    %v488 = vld [vmem:[%s6] sm:$0xff]
    %v489 = vld [vmem:[%s6 + $0x8] sm:$0xff]
    %v490 = vld [vmem:[%s6 + $0x10] sm:$0xff]
    %v491 = vld [vmem:[%s6 + $0x18] sm:$0xff]
    %v492 = vld [vmem:[%s2 + $0xa] sm:$0x1]
    %v493 = vlaneseq
    %v494 = vshrl.u32 %v493, 7
    %v495 = vsub.s32 0, %v494
    %v496 = vrot.slane %v492, %v495
    %v498 = vsel %vm333, %v487, 0
    %500 = vmatprep.subr.mxu0 0.0
    %501 = vmatpush1.msra.mxu0 0.0
    %502 = vmatprep.subr.mxu0 0.0
    %503 = vmatpush1.msra.mxu0 0.0
    %504 = vmatprep.subr.mxu0 0.0
    %505 = vmatpush1.msra.mxu0 0.0
    %506 = vmatprep.subr.mxu0 0.0
    %507 = vmatpush1.msra.mxu0 0.0
    %508 = vmatprep.subr.mxu0 0.0
    %509 = vmatpush1.msra.mxu0 0.0
    %510 = vmatprep.subr.mxu0 0.0
    %511 = vmatpush1.msra.mxu0 0.0
    %512 = vmatprep.subr.mxu0 0.0
    %513 = vmatpush1.msra.mxu0 0.0
    %514 = vmatprep.subr.mxu0 0.0
    %515 = vmatpush1.msra.mxu0 0.0
    %516 = vmatprep.subr.mxu0 0.0
    %517 = vmatpush1.msra.mxu0 0.0
    %518 = vmatprep.subr.mxu0 0.0
    %519 = vmatpush1.msra.mxu0 0.0
    %520 = vmatprep.subr.mxu0 0.0
    %521 = vmatpush1.msra.mxu0 0.0
    %522 = vmatprep.subr.mxu0 0.0
    %523 = vmatpush1.msra.mxu0 0.0
    %524 = vmatprep.subr.mxu0 0.0
    %525 = vmatpush1.msra.mxu0 %v491
    %526 = vmatprep.subr.mxu0 0.0
    %527 = vmatpush1.msra.mxu0 %v490
    %528 = vmatprep.subr.mxu0 0.0
    %529 = vmatpush1.msra.mxu0 %v489
    %530 = vmatprep.subr.mxu0 0.0
    %531 = vmatpush1.msra.mxu0 %v488
    %532 = vmatprep.subr.mxu0 0.0
    %533 = vmatpush2.msra.mxu0 0.0
    %534 = vmatprep.subr.mxu0 0.0
    %535 = vmatpush2.msra.mxu0 0.0
    %536 = vmatprep.subr.mxu0 0.0
    %537 = vmatpush2.msra.mxu0 0.0
    %538 = vmatprep.subr.mxu0 0.0
    %539 = vmatpush2.msra.mxu0 0.0
    %540 = vmatprep.subr.mxu0 0.0
    %541 = vmatpush2.msra.mxu0 0.0
    %542 = vmatprep.subr.mxu0 0.0
    %543 = vmatpush2.msra.mxu0 0.0
    %544 = vmatprep.subr.mxu0 0.0
    %545 = vmatpush2.msra.mxu0 0.0
    %546 = vmatprep.subr.mxu0 0.0
    %547 = vmatpush2.msra.mxu0 0.0
    %548 = vmatprep.subr.mxu0 0.0
    %549 = vmatpush2.msra.mxu0 0.0
    %550 = vmatprep.subr.mxu0 0.0
    %551 = vmatpush2.msra.mxu0 0.0
    %552 = vmatprep.subr.mxu0 0.0
    %553 = vmatpush2.msra.mxu0 0.0
    %554 = vmatprep.subr.mxu0 0.0
    %555 = vmatpush2.msra.mxu0 0.0
    %556 = vmatprep.subr.mxu0 0.0
    %557 = vmatpush2.msra.mxu0 0.0
    %558 = vmatprep.subr.mxu0 0.0
    %559 = vmatpush2.msra.mxu0 0.0
    %560 = vmatprep.subr.mxu0 0.0
    %561 = vmatpush2.msra.mxu0 0.0
    %562 = vmatprep.subr.mxu0 0.0
    %563 = vmatpush2.msra.mxu0 0.0
    %564 = vmatprep.mubr.f32.mxu0 0.0
    %565 = vmatmul.mubr.f32.gmra.mxu0 %v498
    %v566 = vpop.f32.mrf.mxu0
    %v567 = vadd.f32 %v496, %v566
    %v568 = vpop.f32.mrf.mxu0
    %569 = vdwg.mxu0
    %v570 = vmax.f32 %v567, 0.0
    %v571 = vsel %vm101, %v570, -inf
    %572 = vmax.xlane.f32.xlu0 %v571
    %v573 = vpop.xlane.xlu0 %572
    %v574 = vsub.f32 %v570, %v573
    %v575 = vmul.f32 %v574, 1.442695
    %v576 = vpow.pop %v575
    %v577 = vsel %vm101, %v576, 0.0
    %578 = vadd.xlane.f32.xlu0 %v577
    %v579 = vpop.xlane.xlu0 %578
    %v580 = vrcp.pop %v579
    %v581 = vmul.f32 %v579, %v580
    %v582 = vsub.f32 2.0, %v581
    %v583 = vmul.f32 %v580, %v582
    %v584 = vmul.f32 %v576, %v583
    %v585 = vld [vmem:[#allocation7] sm:$0xff]
    %v586 = vld [vmem:[#allocation7 + $0x8] sm:$0xff]
    %v587 = vld [vmem:[%s2 + $0xb] sm:$0x1]
    %v588 = vlaneseq
    %v589 = vshrl.u32 %v588, 7
    %v590 = vsub.s32 0, %v589
    %v591 = vrot.slane %v587, %v590
    %v593 = vsel %vm101, %v584, 0
    %595 = vmatprep.subr.mxu0 0.0
    %596 = vmatpush1.msra.mxu0 0.0
    %597 = vmatprep.subr.mxu0 0.0
    %598 = vmatpush1.msra.mxu0 0.0
    %599 = vmatprep.subr.mxu0 0.0
    %600 = vmatpush1.msra.mxu0 0.0
    %601 = vmatprep.subr.mxu0 0.0
    %602 = vmatpush1.msra.mxu0 0.0
    %603 = vmatprep.subr.mxu0 0.0
    %604 = vmatpush1.msra.mxu0 0.0
    %605 = vmatprep.subr.mxu0 0.0
    %606 = vmatpush1.msra.mxu0 0.0
    %607 = vmatprep.subr.mxu0 0.0
    %608 = vmatpush1.msra.mxu0 0.0
    %609 = vmatprep.subr.mxu0 0.0
    %610 = vmatpush1.msra.mxu0 0.0
    %611 = vmatprep.subr.mxu0 0.0
    %612 = vmatpush1.msra.mxu0 0.0
    %613 = vmatprep.subr.mxu0 0.0
    %614 = vmatpush1.msra.mxu0 0.0
    %615 = vmatprep.subr.mxu0 0.0
    %616 = vmatpush1.msra.mxu0 0.0
    %617 = vmatprep.subr.mxu0 0.0
    %618 = vmatpush1.msra.mxu0 0.0
    %619 = vmatprep.subr.mxu0 0.0
    %620 = vmatpush1.msra.mxu0 0.0
    %621 = vmatprep.subr.mxu0 0.0
    %622 = vmatpush1.msra.mxu0 0.0
    %623 = vmatprep.subr.mxu0 0.0
    %624 = vmatpush1.msra.mxu0 %v586
    %625 = vmatprep.subr.mxu0 0.0
    %626 = vmatpush1.msra.mxu0 %v585
    %627 = vmatprep.subr.mxu0 0.0
    %628 = vmatpush2.msra.mxu0 0.0
    %629 = vmatprep.subr.mxu0 0.0
    %630 = vmatpush2.msra.mxu0 0.0
    %631 = vmatprep.subr.mxu0 0.0
    %632 = vmatpush2.msra.mxu0 0.0
    %633 = vmatprep.subr.mxu0 0.0
    %634 = vmatpush2.msra.mxu0 0.0
    %635 = vmatprep.subr.mxu0 0.0
    %636 = vmatpush2.msra.mxu0 0.0
    %637 = vmatprep.subr.mxu0 0.0
    %638 = vmatpush2.msra.mxu0 0.0
    %639 = vmatprep.subr.mxu0 0.0
    %640 = vmatpush2.msra.mxu0 0.0
    %641 = vmatprep.subr.mxu0 0.0
    %642 = vmatpush2.msra.mxu0 0.0
    %643 = vmatprep.subr.mxu0 0.0
    %644 = vmatpush2.msra.mxu0 0.0
    %645 = vmatprep.subr.mxu0 0.0
    %646 = vmatpush2.msra.mxu0 0.0
    %647 = vmatprep.subr.mxu0 0.0
    %648 = vmatpush2.msra.mxu0 0.0
    %649 = vmatprep.subr.mxu0 0.0
    %650 = vmatpush2.msra.mxu0 0.0
    %651 = vmatprep.subr.mxu0 0.0
    %652 = vmatpush2.msra.mxu0 0.0
    %653 = vmatprep.subr.mxu0 0.0
    %654 = vmatpush2.msra.mxu0 0.0
    %655 = vmatprep.subr.mxu0 0.0
    %656 = vmatpush2.msra.mxu0 0.0
    %657 = vmatprep.subr.mxu0 0.0
    %658 = vmatpush2.msra.mxu0 0.0
    %659 = vmatprep.mubr.f32.mxu0 0.0
    %660 = vmatmul.mubr.f32.gmra.mxu0 %v593
    %v661 = vpop.f32.mrf.mxu0
    %v662 = vadd.f32 %v591, %v661
    %v663 = vpop.f32.mrf.mxu0
    %664 = vdwg.mxu0
    %v665 = vmax.f32 %v662, 0.0
    %v666 = vld [vmem:[#allocation9] sm:$0xff]
    %v667 = vld [vmem:[#allocation9 + $0x8] sm:$0xff]
    %v668 = vld [vmem:[#allocation9 + $0x10] sm:$0xff]
    %v669 = vld [vmem:[#allocation9 + $0x18] sm:$0xff]
    %v670 = vld [vmem:[%s2 + $0xc] sm:$0x1]
    %v671 = vlaneseq
    %v672 = vshrl.u32 %v671, 7
    %v673 = vsub.s32 0, %v672
    %v674 = vrot.slane %v670, %v673
    %v676 = vsel %vm333, %v665, 0
    %678 = vmatprep.subr.mxu0 0.0
    %679 = vmatpush1.msra.mxu0 0.0
    %680 = vmatprep.subr.mxu0 0.0
    %681 = vmatpush1.msra.mxu0 0.0
    %682 = vmatprep.subr.mxu0 0.0
    %683 = vmatpush1.msra.mxu0 0.0
    %684 = vmatprep.subr.mxu0 0.0
    %685 = vmatpush1.msra.mxu0 0.0
    %686 = vmatprep.subr.mxu0 0.0
    %687 = vmatpush1.msra.mxu0 0.0
    %688 = vmatprep.subr.mxu0 0.0
    %689 = vmatpush1.msra.mxu0 0.0
    %690 = vmatprep.subr.mxu0 0.0
    %691 = vmatpush1.msra.mxu0 0.0
    %692 = vmatprep.subr.mxu0 0.0
    %693 = vmatpush1.msra.mxu0 0.0
    %694 = vmatprep.subr.mxu0 0.0
    %695 = vmatpush1.msra.mxu0 0.0
    %696 = vmatprep.subr.mxu0 0.0
    %697 = vmatpush1.msra.mxu0 0.0
    %698 = vmatprep.subr.mxu0 0.0
    %699 = vmatpush1.msra.mxu0 0.0
    %700 = vmatprep.subr.mxu0 0.0
    %701 = vmatpush1.msra.mxu0 0.0
    %702 = vmatprep.subr.mxu0 0.0
    %703 = vmatpush1.msra.mxu0 %v669
    %704 = vmatprep.subr.mxu0 0.0
    %705 = vmatpush1.msra.mxu0 %v668
    %706 = vmatprep.subr.mxu0 0.0
    %707 = vmatpush1.msra.mxu0 %v667
    %708 = vmatprep.subr.mxu0 0.0
    %709 = vmatpush1.msra.mxu0 %v666
    %710 = vmatprep.subr.mxu0 0.0
    %711 = vmatpush2.msra.mxu0 0.0
    %712 = vmatprep.subr.mxu0 0.0
    %713 = vmatpush2.msra.mxu0 0.0
    %714 = vmatprep.subr.mxu0 0.0
    %715 = vmatpush2.msra.mxu0 0.0
    %716 = vmatprep.subr.mxu0 0.0
    %717 = vmatpush2.msra.mxu0 0.0
    %718 = vmatprep.subr.mxu0 0.0
    %719 = vmatpush2.msra.mxu0 0.0
    %720 = vmatprep.subr.mxu0 0.0
    %721 = vmatpush2.msra.mxu0 0.0
    %722 = vmatprep.subr.mxu0 0.0
    %723 = vmatpush2.msra.mxu0 0.0
    %724 = vmatprep.subr.mxu0 0.0
    %725 = vmatpush2.msra.mxu0 0.0
    %726 = vmatprep.subr.mxu0 0.0
    %727 = vmatpush2.msra.mxu0 0.0
    %728 = vmatprep.subr.mxu0 0.0
    %729 = vmatpush2.msra.mxu0 0.0
    %730 = vmatprep.subr.mxu0 0.0
    %731 = vmatpush2.msra.mxu0 0.0
    %732 = vmatprep.subr.mxu0 0.0
    %733 = vmatpush2.msra.mxu0 0.0
    %734 = vmatprep.subr.mxu0 0.0
    %735 = vmatpush2.msra.mxu0 0.0
    %736 = vmatprep.subr.mxu0 0.0
    %737 = vmatpush2.msra.mxu0 0.0
    %738 = vmatprep.subr.mxu0 0.0
    %739 = vmatpush2.msra.mxu0 0.0
    %740 = vmatprep.subr.mxu0 0.0
    %741 = vmatpush2.msra.mxu0 0.0
    %742 = vmatprep.mubr.f32.mxu0 0.0
    %743 = vmatmul.mubr.f32.gmra.mxu0 %v676
    %v744 = vpop.f32.mrf.mxu0
    %v745 = vadd.f32 %v674, %v744
    %v746 = vpop.f32.mrf.mxu0
    %747 = vdwg.mxu0
    %748 = vmax.xlane.f32.xlu0 %v745
    %v749 = vpop.xlane.xlu0 %748
    %v750 = vsub.f32 %v745, %v749
    %v751 = vmul.f32 %v750, 1.442695
    %v752 = vpow.pop %v751
    %753 = vadd.xlane.f32.xlu0 %v752
    %v754 = vpop.xlane.xlu0 %753
    %v755 = vrcp.pop %v754
    %v756 = vmul.f32 %v754, %v755
    %v757 = vsub.f32 2.0, %v756
    %v758 = vmul.f32 %v755, %v757
    %v759 = vmul.f32 %v752, %v758
    %760 = vst [vmem:[%s9] sm:$0xff] %v759
    // Predicated region
    $region58: #{bimodal_forward.1} parent=1 // pred_check
      _
    $region59: #{bimodal_forward.1} parent=1 // pred_check_branch
      %762 = sbr.rel (0) target = $region61
    $region60: #{bimodal_forward.1} parent=1 // pred_region
      _
    $region61: #{bimodal_forward.1} parent=1 // pred_fallthru
      _
    // Predicated region
    $region62: #{bimodal_forward.1} parent=1 // pred_check
      _
    $region63: #{bimodal_forward.1} parent=1 // pred_check_branch
      %764 = sbr.rel (0) target = $region65
    $region64: #{bimodal_forward.1} parent=1 // pred_region
      _
    $region65: #{bimodal_forward.1} parent=1 // pred_fallthru
      _
    %765 = vsyncpa [#allocation3], 1
    %766 = vsyncpa [#allocation5], 1
    %767 = vsyncpa [#allocation8], 1

</llo_original>
